<compile_context>
chip_gen: v7x
topology: tpu7x:2x2x1
jax: 0.10.0
libtpu: 0.0.40
codegen_flags: <defaults>
</compile_context>

<pallas_src>
import functools
import math

import numpy as np
import jax
import jax.numpy as jnp
from jax.experimental import pallas as pl
from jax.experimental.pallas import tpu as pltpu

LANE = 128   # TPU lane width
SUB = 8      # TPU sublane width


def _round_up(x, m):
    return (x + m - 1) // m * m


# ---------------------------------------------------------------------------
# Deterministic parameter construction (stands in for the loaded state_dict)
# ---------------------------------------------------------------------------
def make_nhits_params(key, L, H, hidden, n_layers, pool_sizes, freq_downsamples):
    blocks = []
    for pool_k, freq in zip(pool_sizes, freq_downsamples):
        in_dim = L // pool_k
        h_out = max(1, math.ceil(H / freq))
        theta_dim = L + h_out
        layer_dims = [in_dim] + [hidden] * n_layers + [theta_dim]
        layers = []
        for li in range(len(layer_dims) - 1):
            key, kw, kb = jax.random.split(key, 3)
            din, dout = layer_dims[li], layer_dims[li + 1]
            scale = math.sqrt(2.0 / (din + dout))
            W = jax.random.normal(kw, (din, dout), jnp.float32) * scale
            b = jax.random.normal(kb, (dout,), jnp.float32) * 0.01
            layers.append((W, b))
        blocks.append(dict(pool_k=pool_k, h_out=h_out, layers=layers))
    return blocks


# ---------------------------------------------------------------------------
# One-time probe of pltpu.roll's shift convention (tiny pallas_call).
# Returns True iff it matches jnp.roll (positive shift moves elements toward
# higher lane indices: out[i] = in[(i - shift) % N]).
# ---------------------------------------------------------------------------
def _roll_shifts_like_jnp():
    def kern(x_ref, o_ref):
        o_ref[...] = pltpu.roll(x_ref[...], shift=1, axis=1)

    x = jnp.tile(jnp.arange(LANE, dtype=jnp.float32)[None, :], (SUB, 1))
    y = pl.pallas_call(
        kern, out_shape=jax.ShapeDtypeStruct((SUB, LANE), jnp.float32)
    )(x)
    return bool(np.asarray(y)[0, 1] == 0.0)   # jnp.roll convention: out[1] = in[0]


# ---------------------------------------------------------------------------
# Pack / pad / fold parameters for the fused kernel
# ---------------------------------------------------------------------------
def _pad_mat(W, D):
    W = np.asarray(W, np.float32)
    out = np.zeros((D, D), np.float32)
    out[: W.shape[0], : W.shape[1]] = W
    return out


def _pad_vec(b, D):
    b = np.asarray(b, np.float32)
    out = np.zeros((D,), np.float32)
    out[: b.shape[0]] = b
    return out


def pack_params(blocks, L, H, roll_like_jnp):
    """Pad/fold/stack parameters:
       * first hidden weight of each block absorbs the maxpool compaction matrix
         (row j*pool_k holds W1 row j, every other row is zero),
       * nearest-neighbour interpolation is folded into the forecast head,
       * backcast + forecast heads are concatenated into one (Dpad, 2*Dpad) matrix,
       * matmul weights stored bf16, biases f32 lane-dense."""
    dims = [L, H, LANE]
    for blk in blocks:
        for (W, _) in blk["layers"]:
            dims += [int(W.shape[0]), int(W.shape[1])]
    Dpad = _round_up(max(dims), LANE)

    w_list, b_list, wh_list, bh_list, plan = [], [], [], [], []
    for blk in blocks:
        k, h_out, layers = blk["pool_k"], blk["h_out"], blk["layers"]

        # lane-roll amounts so that rolled[:, i] == res[:, i + c]
        if roll_like_jnp:
            shifts = tuple((Dpad - c) % Dpad for c in range(1, k))
        else:
            shifts = tuple(range(1, k))

        # ---- first hidden layer: fold the 0/1 pool-compaction matrix into W ----
        #   pooled[:, j] = max_c res[:, j*k + c]   (j < L//k)
        #   pooled @ W0 == m @ W0f, with W0f[j*k, :] = W0[j, :] and zero elsewhere,
        # where m[:, j*k] = max_c res[:, j*k + c] is built in-kernel via roll + max.
        W0, b0 = layers[0]
        W0 = np.asarray(W0, np.float32)
        W0f = np.zeros((Dpad, Dpad), np.float32)
        W0f[np.arange(W0.shape[0]) * k, : W0.shape[1]] = W0
        hid_ids = [len(w_list)]
        w_list.append(W0f)
        b_list.append(_pad_vec(b0, Dpad))

        # ---- remaining hidden layers ----
        for (W, b) in layers[1:-1]:
            hid_ids.append(len(w_list))
            w_list.append(_pad_mat(W, Dpad))
            b_list.append(_pad_vec(b, Dpad))

        # ---- output layer: backcast | (interp-folded) forecast, concatenated ----
        W_last, b_last = layers[-1]
        W_last = np.asarray(W_last, np.float32)
        b_last = np.asarray(b_last, np.float32)
        idx = np.clip(np.floor(np.arange(H) * (h_out / H)).astype(np.int64), 0, h_out - 1)
        Wb, bb = W_last[:, :L], b_last[:L]                 # backcast head
        Wf, bf = W_last[:, L:][:, idx], b_last[L:][idx]    # forecast head (interp folded)
        WH = np.zeros((Dpad, 2 * Dpad), np.float32)
        WH[: Wb.shape[0], :L] = Wb
        WH[: Wf.shape[0], Dpad: Dpad + H] = Wf
        BH = np.zeros((2 * Dpad,), np.float32)
        BH[:L] = bb
        BH[Dpad: Dpad + H] = bf
        head_id = len(wh_list)
        wh_list.append(WH)
        bh_list.append(BH)

        plan.append(dict(pool_k=k, shifts=shifts, hid_ids=tuple(hid_ids),
                         head_id=head_id))

    packed = dict(
        W=jnp.asarray(np.stack(w_list), jnp.bfloat16),     # (nw,   Dpad, Dpad)   bf16
        B=jnp.asarray(np.stack(b_list), jnp.float32),      # (nw,   Dpad)         f32
        WH=jnp.asarray(np.stack(wh_list), jnp.bfloat16),   # (nblk, Dpad, 2*Dpad) bf16
        BH=jnp.asarray(np.stack(bh_list), jnp.float32),    # (nblk, 2*Dpad)       f32
    )
    return packed, tuple(plan), Dpad


# ---------------------------------------------------------------------------
# Fused Pallas kernel: full N-HiTS forward for one batch tile
# ---------------------------------------------------------------------------
def _nhits_kernel(x_ref, w_ref, b_ref, wh_ref, bh_ref, o_ref, *, plan, L, H, Dpad):
    x = x_ref[...]                       # (TB, Dpad) f32; columns >= L are zero
    res = x

    # Level init: forecast[:, t] = x[:, L-1] for t < H.
    # Masked XLU lane-reduce + VPU masked lane-broadcast; exact f32, no MXU work.
    col = jax.lax.broadcasted_iota(jnp.int32, x.shape, 1)
    level = jnp.sum(jnp.where(col == L - 1, x, 0.0), axis=1, keepdims=True)   # (TB, 1)
    fc = jnp.where(col < H, level, 0.0)                                        # (TB, Dpad)

    for blk in plan:
        # ---- MaxPool1d(pool_k): windowed max via lane rotation (XLU) + VPU max ----
        # Only columns j*pool_k of `m` are meaningful; every other column (incl. the
        # roll wrap-around) hits a zero row of the folded first-layer weight.
        m = res
        for shift in blk["shifts"]:
            m = jnp.maximum(m, pltpu.roll(res, shift=shift, axis=1))

        # ---- hidden MLP layers: bf16 MXU matmuls, f32 accumulate + bias + ReLU ----
        h = m
        for wid in blk["hid_ids"]:
            y = jnp.dot(h.astype(jnp.bfloat16), w_ref[wid],
                        preferred_element_type=jnp.float32) + b_ref[pl.ds(wid, 1), :]
            h = jnp.maximum(y, 0.0)

        # ---- fused backcast|forecast head: one (TB,Dpad)@(Dpad,2*Dpad) bf16 dot ----
        hid = blk["head_id"]
        y = jnp.dot(h.astype(jnp.bfloat16), wh_ref[hid],
                    preferred_element_type=jnp.float32) + bh_ref[pl.ds(hid, 1), :]
        res = res - y[:, :Dpad]          # backcast residual (padded cols stay zero)
        fc = fc + y[:, Dpad:]            # interp-folded block forecast

    o_ref[...] = fc                      # lane-dense (TB, Dpad) store


def nhits_pallas(packed, x_pad, *, TB, plan, L, H, Dpad):
    Bp = x_pad.shape[0]
    nw = packed["W"].shape[0]
    nblk = packed["WH"].shape[0]
    kernel = functools.partial(_nhits_kernel, plan=plan, L=L, H=H, Dpad=Dpad)
    return pl.pallas_call(
        kernel,
        out_shape=jax.ShapeDtypeStruct((Bp, Dpad), jnp.float32),
        grid_spec=pltpu.PrefetchScalarGridSpec(
            num_scalar_prefetch=0,
            grid=(Bp // TB,),
            in_specs=[
                pl.BlockSpec((TB, Dpad), lambda i: (i, 0)),                 # batch tile
                pl.BlockSpec((nw, Dpad, Dpad), lambda i: (0, 0, 0)),        # hidden W (resident)
                pl.BlockSpec((nw, Dpad), lambda i: (0, 0)),                 # hidden b (resident)
                pl.BlockSpec((nblk, Dpad, 2 * Dpad), lambda i: (0, 0, 0)),  # head W (resident)
                pl.BlockSpec((nblk, 2 * Dpad), lambda i: (0, 0)),           # head b (resident)
            ],
            out_specs=pl.BlockSpec((TB, Dpad), lambda i: (i, 0)),
        ),
        compiler_params=pltpu.CompilerParams(
            dimension_semantics=("parallel",),
        ),
    )(x_pad, packed["W"], packed["B"], packed["WH"], packed["BH"])


# ---------------------------------------------------------------------------
# Batch tiling: >= 2 grid steps when possible (v7x has 2 TensorCores), tiles
# capped near 512 rows, padding waste < 8 rows per tile.
# ---------------------------------------------------------------------------
def _batch_tiling(B):
    Bp = _round_up(max(B, SUB), SUB)
    n_tiles = max(2, -(-Bp // 512))
    TB = _round_up(-(-Bp // n_tiles), SUB)
    Bp = _round_up(Bp, TB)
    return Bp, TB


# ---------------------------------------------------------------------------
# Wrapper (JAX/Pallas equivalent of the PyTorch `Wrapper` module)
# ---------------------------------------------------------------------------
class WrapperPallas:
    def __init__(self, H, L, nhits_params, key):
        self.H, self.L = H, L
        self._blocks = make_nhits_params(key, L, H, **nhits_params)  # f32 reference params
        roll_like_jnp = _roll_shifts_like_jnp()
        self.packed, self.plan, self.Dpad = pack_params(self._blocks, L, H, roll_like_jnp)
        self._fwd = jax.jit(self._forward)

    def _forward(self, x):
        B = x.shape[0]
        Bp, TB = _batch_tiling(B)
        x_pad = jnp.zeros((Bp, self.Dpad), jnp.float32)
        x_pad = x_pad.at[:B, : self.L].set(x.astype(jnp.float32))
        out = nhits_pallas(self.packed, x_pad, TB=TB, plan=self.plan,
                           L=self.L, H=self.H, Dpad=self.Dpad)
        return out[:B, : self.H]

    def __call__(self, inputs):
        return self._fwd(inputs)


# ---------------------------------------------------------------------------
# Pure-JAX reference (f32) of the same forward, for a sanity check
# ---------------------------------------------------------------------------
def nhits_reference(blocks, x, L, H):
    res = x
    fc = jnp.repeat(x[:, -1:], H, axis=1)
    for blk in blocks:
        k = blk["pool_k"]
        pooled = jnp.max(res.reshape(res.shape[0], L // k, k), axis=-1) if k > 1 else res
        h = pooled
        n = len(blk["layers"])
        for li, (W, b) in enumerate(blk["layers"]):
            h = h @ W + b
            if li < n - 1:
                h = jnp.maximum(h, 0.0)
        backcast, knots = h[:, :L], h[:, L:]
        idx = jnp.floor(jnp.arange(H) * (knots.shape[1] / H)).astype(jnp.int32)
        fc = fc + knots[:, idx]
        res = res - backcast
    return fc


# ---------------------------------------------------------------------------
if __name__ == "__main__":
    # Small config consistent with the script: L = input_size, H = horizon.
    B, L, H = 4, 32, 8
    nhits_params = dict(
        hidden=64,
        n_layers=2,
        pool_sizes=[2, 2, 1],
        freq_downsamples=[4, 2, 1],
    )

    key = jax.random.PRNGKey(0)
    key_params, key_data = jax.random.split(key)

    model = WrapperPallas(H, L, nhits_params, key_params)

    # deterministic example "test_series[:, :L]" input, shape (ntest, L)
    inputs = jax.random.normal(key_data, (B, L), dtype=jnp.float32)

    out = model(inputs)
    out = jax.block_until_ready(out)
    assert out.shape == (B, H) and out.dtype == jnp.float32

    # correctness check vs f32 reference (kernel uses bf16 weights -> loose tol)
    ref = nhits_reference(model._blocks, inputs, L, H)
    np.testing.assert_allclose(np.asarray(out), np.asarray(ref), rtol=0.1, atol=0.1)

    print("KERNEL_OK")
</pallas_src>

<mosaic_0001>
module attributes {stable_mosaic.version = 11 : i64} {
  func.func @kern(%arg0: memref<8x128xf32, #tpu.memory_space<vmem>>, %arg1: memref<8x128xf32, #tpu.memory_space<vmem>>) attributes {dimension_semantics = [], scalar_prefetch = 0 : i64, scratch_operands = 0 : i64, tpu.core_type = #tpu.core_type<tc>} {
    %c0 = arith.constant 0 : index
    %c0_0 = arith.constant 0 : index
    %0 = vector.load %arg0[%c0, %c0_0] : memref<8x128xf32, #tpu.memory_space<vmem>>, vector<8x128xf32>
    %c1_i32 = arith.constant 1 : i32
    %1 = tpu.dynamic_rotate %0 by %c1_i32 dim 1 : vector<8x128xf32>, i32 -> vector<8x128xf32>
    %c0_1 = arith.constant 0 : index
    %c0_2 = arith.constant 0 : index
    %2 = vector.load %arg1[%c0_1, %c0_2] : memref<8x128xf32, #tpu.memory_space<vmem>>, vector<8x128xf32>
    tpu.vector_store %arg1[%c0_1, %c0_2], %1 {strides = array<i32>} : memref<8x128xf32, #tpu.memory_space<vmem>>, vector<8x128xf32>,
    return
  }
}

</mosaic_0001>

<llo_original>
// kernel: tpu_custom_call.1
$region0: #{tpu_custom_call.1}
  #allocation0 [shape = 'u32[]', space=smem, size = 0x4, offset = 0x4, fixed_abs, tag = 'smem constant byte address 0x4 - core index']
  #allocation1 [shape = 'u32[144,128]{1,0:T(1,128)}', space=vmem, size = 0x12000, scoped, tag = 'internal scratch']
  %s0 = inlined_call_operand.hbm [shape: f32[8,128], index: 0, kind: input, shape index: {}]
  %s1 = inlined_call_operand.hbm [shape: f32[8,128], index: 1, kind: output, shape index: {}]
  %s2 = sld [smem:[#allocation0]]
  $region18: #{tpu_custom_call.1} parent=0
    _
  %s4 = ssub.s32 1, %s2
  %s5 = scalar_select 0, %s4, %s2
  $region1: #{tpu_custom_call.1} parent=0
    #allocation2 [shape = 'u8[4096]{0}', space=vmem, size = 0x1000, scoped, tag = 'input window, operand 0, single buffered']
    #allocation3 [shape = 's32[1]{0}', space=sflag, size = 0x4, scoped, tag = 'scoped memory for tpu_custom_call.1']
    #allocation4 [shape = 's32[1]{0}', space=sflag, size = 0x4, scoped, tag = 'scoped memory for tpu_custom_call.1']
    #allocation5 [shape = 'u8[4096]{0}', space=vmem, size = 0x1000, scoped, tag = 'output window, operand 0, single buffered']
    %6 = vsyncpa [#allocation3], 0
    %7 = vsyncpa [#allocation4], 0
    // Predicated region
    $region2: #{tpu_custom_call.1} parent=1 // pred_check
      _
    $region3: #{tpu_custom_call.1} parent=1 // pred_check_branch
      %9 = sbr.rel (0) target = $region5
    $region4: #{tpu_custom_call.1} parent=1 // pred_region
      %s11 = ssub.s32 128, 128
      %12 = vsyncadd [#allocation3], %s11
      %s14 = sshll.u32 [#allocation2], 4
      %s15 = int_to_ptr.vmem [resolvable:$true] %s14
      %17 = dma.hbm_to_vmem [thread:$0]  %s0, 128, %s15, [#allocation3]
    $region5: #{tpu_custom_call.1} parent=1 // pred_fallthru
      _
    // Predicated region
    $region6: #{tpu_custom_call.1} parent=1 // pred_check
      _
    $region7: #{tpu_custom_call.1} parent=1 // pred_check_branch
      %19 = sbr.rel (0) target = $region9
    $region8: #{tpu_custom_call.1} parent=1 // pred_region
      %20 = dma.done [#allocation3], 128
    $region9: #{tpu_custom_call.1} parent=1 // pred_fallthru
      _
    %v21 = vld [vmem:[#allocation2] sm:$0xff]
    %22 = vrot.lane.b32.xlu0 %v21, 1
    %v23 = vpop.permute.xlu0 %22
    %24 = vst [vmem:[#allocation5] sm:$0xff] %v23
    // Predicated region
    $region10: #{tpu_custom_call.1} parent=1 // pred_check
      _
    $region11: #{tpu_custom_call.1} parent=1 // pred_check_branch
      %26 = sbr.rel (0) target = $region13
    $region12: #{tpu_custom_call.1} parent=1 // pred_region
      %s28 = ssub.s32 128, 128
      %29 = vsyncadd [#allocation4], %s28
      %s31 = sshll.u32 [#allocation5], 4
      %s32 = int_to_ptr.vmem [resolvable:$true] %s31
      %34 = dma.vmem_to_hbm [thread:$0]  %s32, 128, %s1, [#allocation4]
    $region13: #{tpu_custom_call.1} parent=1 // pred_fallthru
      _
    // Predicated region
    $region14: #{tpu_custom_call.1} parent=1 // pred_check
      _
    $region15: #{tpu_custom_call.1} parent=1 // pred_check_branch
      %36 = sbr.rel (0) target = $region17
    $region16: #{tpu_custom_call.1} parent=1 // pred_region
      %37 = dma.done [#allocation4], 128
    $region17: #{tpu_custom_call.1} parent=1 // pred_fallthru
      _
    %38 = vsyncpa [#allocation3], 1
    %39 = vsyncpa [#allocation4], 1

</llo_original>
